<compile_context>
chip_gen: v7x
topology: tpu7x:2x2x1
jax: 0.10.0
libtpu: 0.0.40
codegen_flags: <defaults>
</compile_context>

<pallas_src>
import functools

import jax
import jax.numpy as jnp
from jax.experimental import pallas as pl
from jax.experimental.pallas import tpu as pltpu


_LANE = 128
_BLOCK_ORDER = ("wa_e", "wc_e", "wa_h", "whr", "whz", "whn",
                "wc_a", "wir", "wiz", "win", "wo")


def _round_up(x, m):
    return ((x + m - 1) // m) * m


def _layout(H, L, V):
    """128-lane-aligned column layout of the packed weight / bias slabs."""
    widths = {"wa_e": L, "wc_e": H, "wa_h": L, "whr": H, "whz": H, "whn": H,
              "wc_a": H, "wir": H, "wiz": H, "win": H, "wo": V}
    offs, pws, off = {}, {}, 0
    for name in _BLOCK_ORDER:
        offs[name] = off
        pws[name] = _round_up(widths[name], _LANE)
        off += pws[name]
    return offs, pws, off


def attn_decoder_kernel(act_ref, enc_ref, w_ref, b_ref, out_ref,
                        *, H, L, V, offs, pws):
    f32 = jnp.float32
    emb = act_ref[0:1, :]          # (1, H) embedded token (dropout = identity)
    hid = act_ref[1:2, :]          # (1, H) previous hidden state

    # ---- fused MXU dots, grouped by source operand (issued before softmax) --
    e0 = offs["wa_e"]
    e1 = offs["wc_e"] + pws["wc_e"]
    eh = jnp.dot(emb, w_ref[:, e0:e1], preferred_element_type=f32)
    h0 = offs["wa_h"]
    h1 = offs["whn"] + pws["whn"]
    hh = jnp.dot(hid, w_ref[:, h0:h1], preferred_element_type=f32)

    d_wc_e = offs["wc_e"] - e0
    d_whr = offs["whr"] - h0
    d_whz = offs["whz"] - h0
    d_whn = offs["whn"] - h0

    # ---- attention weights: softmax(emb@wa_e + hid@wa_h + ba) over dim=1 ----
    attn_logits = (eh[:, 0:L] + hh[:, 0:L]
                   + b_ref[:, offs["wa_e"]:offs["wa_e"] + L])
    m = jnp.max(attn_logits, axis=1, keepdims=True)
    e = jnp.exp(attn_logits - m)
    # exact reciprocal keeps 1e-5 parity with the reference
    attn_w = e * pl.reciprocal(jnp.sum(e, axis=1, keepdims=True), approx=False)

    # ---- attn_applied = attn_w @ encoder_outputs ----
    attn_applied = jnp.dot(attn_w, enc_ref[...],
                           preferred_element_type=f32)            # (1, H)

    # ---- attn_combine + relu ----
    ca = jnp.dot(attn_applied,
                 w_ref[:, offs["wc_a"]:offs["wc_a"] + pws["wc_a"]],
                 preferred_element_type=f32)
    x = (eh[:, d_wc_e:d_wc_e + H] + ca[:, 0:H]
         + b_ref[:, offs["wc_e"]:offs["wc_e"] + H])
    x = jnp.maximum(x, 0.0)                                        # (1, H)

    # ---- single-step GRU (PyTorch gate order r, z, n) ----
    g0 = offs["wir"]
    g1 = offs["win"] + pws["win"]
    gi = jnp.dot(x, w_ref[:, g0:g1], preferred_element_type=f32)
    d_wiz = offs["wiz"] - g0
    d_win = offs["win"] - g0

    i_r = gi[:, 0:H] + b_ref[:, offs["wir"]:offs["wir"] + H]
    i_z = gi[:, d_wiz:d_wiz + H] + b_ref[:, offs["wiz"]:offs["wiz"] + H]
    i_n = gi[:, d_win:d_win + H] + b_ref[:, offs["win"]:offs["win"] + H]
    h_r = hh[:, d_whr:d_whr + H] + b_ref[:, offs["whr"]:offs["whr"] + H]
    h_z = hh[:, d_whz:d_whz + H] + b_ref[:, offs["whz"]:offs["whz"] + H]
    h_n = hh[:, d_whn:d_whn + H] + b_ref[:, offs["whn"]:offs["whn"] + H]

    r = jax.nn.sigmoid(i_r + h_r)
    z = jax.nn.sigmoid(i_z + h_z)
    n = jnp.tanh(i_n + r * h_n)
    h_new = (1.0 - z) * n + z * hid                                # (1, H)

    # ---- output projection + log_softmax over dim=1 ----
    lo = jnp.dot(h_new, w_ref[:, offs["wo"]:offs["wo"] + pws["wo"]],
                 preferred_element_type=f32)
    logits = lo[:, 0:V] + b_ref[:, offs["wo"]:offs["wo"] + V]
    m2 = jnp.max(logits, axis=1, keepdims=True)
    logp = logits - m2 - jnp.log(
        jnp.sum(jnp.exp(logits - m2), axis=1, keepdims=True))

    # ---- single packed output tile (one writeback DMA instead of three) ----
    out_ref[0:1, 0:V] = logp
    out_ref[1:2, 0:H] = h_new
    out_ref[2:3, 0:L] = attn_w


def pack_params(params):
    """One-time repack of the PyTorch-layout weights into two VMEM-friendly
    slabs (column-concatenated, 128-lane aligned). Called once, outside the
    per-decode-step path."""
    H = params["hidden_size"]
    L = params["max_length"]
    V = params["output_size"]
    offs, _, C = _layout(H, L, V)

    wa_t = params["attn_w"].T            # (2H, L)
    wc_t = params["combine_w"].T         # (2H, H)
    wih_t = params["gru_w_ih"].T         # (H, 3H)  gate order r, z, n
    whh_t = params["gru_w_hh"].T         # (H, 3H)
    bih = params["gru_b_ih"]
    bhh = params["gru_b_hh"]

    blocks = {
        "wa_e": wa_t[:H], "wa_h": wa_t[H:],
        "wc_e": wc_t[:H], "wc_a": wc_t[H:],
        "whr": whh_t[:, :H], "whz": whh_t[:, H:2 * H], "whn": whh_t[:, 2 * H:],
        "wir": wih_t[:, :H], "wiz": wih_t[:, H:2 * H], "win": wih_t[:, 2 * H:],
        "wo": params["out_w"].T,         # (H, V)
    }
    biases = {
        "wa_e": params["attn_b"],        # shared attn bias lives under wa_e
        "wc_e": params["combine_b"],     # shared combine bias lives under wc_e
        "whr": bhh[:H], "whz": bhh[H:2 * H], "whn": bhh[2 * H:],
        "wir": bih[:H], "wiz": bih[H:2 * H], "win": bih[2 * H:],
        "wo": params["out_b"],
    }

    w_slab = jnp.zeros((H, C), jnp.float32)
    b_slab = jnp.zeros((1, C), jnp.float32)
    for name in _BLOCK_ORDER:
        blk = blocks[name]
        w_slab = w_slab.at[:, offs[name]:offs[name] + blk.shape[1]].set(blk)
        if name in biases:
            bv = biases[name]
            b_slab = b_slab.at[0, offs[name]:offs[name] + bv.shape[0]].set(bv)

    return {"w": w_slab, "b": b_slab, "embedding": params["embedding"],
            "H": H, "L": L, "V": V}


@functools.partial(jax.jit, static_argnames=("H", "L", "V"))
def _attn_decoder_step(w_slab, b_slab, embedding, token_idx, hidden,
                       encoder_outputs, *, H, L, V):
    offs, pws, _ = _layout(H, L, V)
    out_w = _round_up(max(V, H, L), _LANE)

    # glue: embedding lookup + dropout(eval = identity) outside the kernel
    embedded = embedding[token_idx[0, 0]].reshape(1, H)
    hid2d = hidden.reshape(1, H)
    acts = jnp.concatenate([embedded, hid2d], axis=0)      # (2, H): 1 DMA

    kernel = functools.partial(attn_decoder_kernel, H=H, L=L, V=V,
                               offs=offs, pws=pws)
    vmem = pl.BlockSpec(memory_space=pltpu.MemorySpace.VMEM)
    out = pl.pallas_call(
        kernel,
        out_shape=jax.ShapeDtypeStruct((3, out_w), jnp.float32),
        in_specs=[vmem, vmem, vmem, vmem],
        out_specs=vmem,
    )(acts, encoder_outputs, w_slab, b_slab)

    log_probs = out[0:1, :V]
    h_new = out[1:2, :H].reshape(1, 1, H)
    attn_w = out[2:3, :L]
    return log_probs, h_new, attn_w


def attn_decoder_forward(packed, token_idx, hidden, encoder_outputs):
    return _attn_decoder_step(packed["w"], packed["b"], packed["embedding"],
                              token_idx, hidden, encoder_outputs,
                              H=packed["H"], L=packed["L"], V=packed["V"])


def reference_forward(params, token_idx, hidden, encoder_outputs):
    """Pure-JAX reference mirroring the PyTorch module (eval mode)."""
    H = params["hidden_size"]
    emb = params["embedding"][token_idx[0, 0]].reshape(1, H)
    hid = hidden.reshape(1, H)
    cat1 = jnp.concatenate([emb, hid], axis=1)
    attn_logits = cat1 @ params["attn_w"].T + params["attn_b"]
    attn_w = jax.nn.softmax(attn_logits, axis=1)
    attn_applied = attn_w @ encoder_outputs
    cat2 = jnp.concatenate([emb, attn_applied], axis=1)
    x = jax.nn.relu(cat2 @ params["combine_w"].T + params["combine_b"])
    gi = x @ params["gru_w_ih"].T + params["gru_b_ih"]
    gh = hid @ params["gru_w_hh"].T + params["gru_b_hh"]
    i_r, i_z, i_n = gi[:, :H], gi[:, H:2 * H], gi[:, 2 * H:]
    h_r, h_z, h_n = gh[:, :H], gh[:, H:2 * H], gh[:, 2 * H:]
    r = jax.nn.sigmoid(i_r + h_r)
    z = jax.nn.sigmoid(i_z + h_z)
    n = jnp.tanh(i_n + r * h_n)
    h_new = (1.0 - z) * n + z * hid
    logits = h_new @ params["out_w"].T + params["out_b"]
    log_probs = jax.nn.log_softmax(logits, axis=1)
    return log_probs, h_new.reshape(1, 1, H), attn_w


def init_params(key, hidden_size, output_size, max_length):
    ks = jax.random.split(key, 11)
    s = 0.1
    return {
        "hidden_size": hidden_size,
        "output_size": output_size,
        "max_length": max_length,
        "embedding": jax.random.normal(ks[0], (output_size, hidden_size), jnp.float32) * s,
        "attn_w": jax.random.normal(ks[1], (max_length, 2 * hidden_size), jnp.float32) * s,
        "attn_b": jax.random.normal(ks[2], (max_length,), jnp.float32) * s,
        "combine_w": jax.random.normal(ks[3], (hidden_size, 2 * hidden_size), jnp.float32) * s,
        "combine_b": jax.random.normal(ks[4], (hidden_size,), jnp.float32) * s,
        "gru_w_ih": jax.random.normal(ks[5], (3 * hidden_size, hidden_size), jnp.float32) * s,
        "gru_w_hh": jax.random.normal(ks[6], (3 * hidden_size, hidden_size), jnp.float32) * s,
        "gru_b_ih": jax.random.normal(ks[7], (3 * hidden_size,), jnp.float32) * s,
        "gru_b_hh": jax.random.normal(ks[8], (3 * hidden_size,), jnp.float32) * s,
        "out_w": jax.random.normal(ks[9], (output_size, hidden_size), jnp.float32) * s,
        "out_b": jax.random.normal(ks[10], (output_size,), jnp.float32) * s,
    }


if __name__ == "__main__":
    HIDDEN = 32        # hidden_size
    VOCAB = 64         # output_size
    MAX_LEN = 16       # ATTN_DECODER_RNN_MAX_LENGTH

    key = jax.random.PRNGKey(0)
    kp, kh, ke = jax.random.split(key, 3)
    params = init_params(kp, HIDDEN, VOCAB, MAX_LEN)
    packed = pack_params(params)       # one-time weight repack, not per step

    token_idx = jnp.array([[3]], dtype=jnp.int32)                         # input (1,1)
    hidden = jax.random.normal(kh, (1, 1, HIDDEN), jnp.float32) * 0.1     # initHidden-like
    encoder_outputs = jax.random.normal(ke, (MAX_LEN, HIDDEN), jnp.float32) * 0.1

    log_probs, h_new, attn_w = jax.block_until_ready(
        attn_decoder_forward(packed, token_idx, hidden, encoder_outputs))

    # correctness check against a pure-JAX reference of the PyTorch math
    ref_lp, ref_h, ref_aw = reference_forward(params, token_idx, hidden, encoder_outputs)
    assert jnp.allclose(log_probs, ref_lp, atol=1e-5), "log_probs mismatch"
    assert jnp.allclose(h_new, ref_h, atol=1e-5), "hidden mismatch"
    assert jnp.allclose(attn_w, ref_aw, atol=1e-5), "attn_weights mismatch"
    assert log_probs.shape == (1, VOCAB)
    assert h_new.shape == (1, 1, HIDDEN)
    assert attn_w.shape == (1, MAX_LEN)

    print("KERNEL_OK")
</pallas_src>

<mosaic_0001>
module attributes {stable_mosaic.version = 11 : i64} {
  func.func @attn_decoder_kernel(%arg0: memref<2x32xf32, #tpu.memory_space<vmem>>, %arg1: memref<16x32xf32, #tpu.memory_space<vmem>>, %arg2: memref<32x1408xf32, #tpu.memory_space<vmem>>, %arg3: memref<1x1408xf32, #tpu.memory_space<vmem>>, %arg4: memref<3x128xf32, #tpu.memory_space<vmem>>) attributes {dimension_semantics = [], scalar_prefetch = 0 : i64, scratch_operands = 0 : i64, tpu.core_type = #tpu.core_type<tc>} {
    %c0 = arith.constant 0 : index
    %c0_0 = arith.constant 0 : index
    %0 = vector.load %arg0[%c0, %c0_0] : memref<2x32xf32, #tpu.memory_space<vmem>>, vector<1x32xf32>
    %c1 = arith.constant 1 : index
    %c0_1 = arith.constant 0 : index
    %1 = vector.load %arg0[%c1, %c0_1] : memref<2x32xf32, #tpu.memory_space<vmem>>, vector<1x32xf32>
    %c0_2 = arith.constant 0 : index
    %c0_3 = arith.constant 0 : index
    %2 = vector.load %arg2[%c0_2, %c0_3] : memref<32x1408xf32, #tpu.memory_space<vmem>>, vector<32x256xf32>
    %cst = arith.constant dense<0.000000e+00> : vector<1x256xf32>
    %3 = tpu.matmul %0, %2, %cst {dimension_numbers = #tpu.dot_dimension_numbers<[1], [0], [0], [1], [0, 0, 1, 1], [], []>} : vector<1x32xf32>, vector<32x256xf32>, vector<1x256xf32> -> vector<1x256xf32>
    %c0_4 = arith.constant 0 : index
    %c256 = arith.constant 256 : index
    %4 = vector.load %arg2[%c0_4, %c256] : memref<32x1408xf32, #tpu.memory_space<vmem>>, vector<32x512xf32>
    %cst_5 = arith.constant dense<0.000000e+00> : vector<1x512xf32>
    %5 = tpu.matmul %1, %4, %cst_5 {dimension_numbers = #tpu.dot_dimension_numbers<[1], [0], [0], [1], [0, 0, 1, 1], [], []>} : vector<1x32xf32>, vector<32x512xf32>, vector<1x512xf32> -> vector<1x512xf32>
    %6 = vector.extract_strided_slice %3 {offsets = [0, 0], sizes = [1, 16], strides = [1, 1]} : vector<1x256xf32> to vector<1x16xf32>
    %7 = vector.extract_strided_slice %5 {offsets = [0, 0], sizes = [1, 16], strides = [1, 1]} : vector<1x512xf32> to vector<1x16xf32>
    %8 = arith.addf %6, %7 : vector<1x16xf32>
    %c0_6 = arith.constant 0 : index
    %c0_7 = arith.constant 0 : index
    %9 = vector.load %arg3[%c0_6, %c0_7] : memref<1x1408xf32, #tpu.memory_space<vmem>>, vector<1x16xf32>
    %10 = arith.addf %8, %9 : vector<1x16xf32>
    %cst_8 = arith.constant dense<0xFF800000> : vector<1xf32>
    %11 = vector.multi_reduction <maximumf>, %10, %cst_8 [1] : vector<1x16xf32> to vector<1xf32>
    %12 = vector.shape_cast %11 : vector<1xf32> to vector<1x1xf32>
    %13 = vector.broadcast %12 : vector<1x1xf32> to vector<1x16xf32>
    %14 = arith.subf %10, %13 : vector<1x16xf32>
    %15 = math.exp %14 : vector<1x16xf32>
    %cst_9 = arith.constant dense<0.000000e+00> : vector<1xf32>
    %16 = vector.multi_reduction <add>, %15, %cst_9 [1] : vector<1x16xf32> to vector<1xf32>
    %17 = vector.shape_cast %16 : vector<1xf32> to vector<1x1xf32>
    %18 = tpu.reciprocal %17 : vector<1x1xf32> -> vector<1x1xf32>
    %19 = vector.broadcast %18 : vector<1x1xf32> to vector<1x16xf32>
    %20 = arith.mulf %15, %19 : vector<1x16xf32>
    %c0_10 = arith.constant 0 : index
    %c0_11 = arith.constant 0 : index
    %21 = vector.load %arg1[%c0_10, %c0_11] : memref<16x32xf32, #tpu.memory_space<vmem>>, vector<16x32xf32>
    %cst_12 = arith.constant dense<0.000000e+00> : vector<1x32xf32>
    %22 = tpu.matmul %20, %21, %cst_12 {dimension_numbers = #tpu.dot_dimension_numbers<[1], [0], [0], [1], [0, 0, 1, 1], [], []>} : vector<1x16xf32>, vector<16x32xf32>, vector<1x32xf32> -> vector<1x32xf32>
    %c0_13 = arith.constant 0 : index
    %c768 = arith.constant 768 : index
    %23 = vector.load %arg2[%c0_13, %c768] : memref<32x1408xf32, #tpu.memory_space<vmem>>, vector<32x128xf32>
    %cst_14 = arith.constant dense<0.000000e+00> : vector<1x128xf32>
    %24 = tpu.matmul %22, %23, %cst_14 {dimension_numbers = #tpu.dot_dimension_numbers<[1], [0], [0], [1], [0, 0, 1, 1], [], []>} : vector<1x32xf32>, vector<32x128xf32>, vector<1x128xf32> -> vector<1x128xf32>
    %25 = vector.extract_strided_slice %3 {offsets = [0, 128], sizes = [1, 32], strides = [1, 1]} : vector<1x256xf32> to vector<1x32xf32>
    %26 = vector.extract_strided_slice %24 {offsets = [0, 0], sizes = [1, 32], strides = [1, 1]} : vector<1x128xf32> to vector<1x32xf32>
    %27 = arith.addf %25, %26 : vector<1x32xf32>
    %c0_15 = arith.constant 0 : index
    %c128 = arith.constant 128 : index
    %28 = vector.load %arg3[%c0_15, %c128] : memref<1x1408xf32, #tpu.memory_space<vmem>>, vector<1x32xf32>
    %29 = arith.addf %27, %28 : vector<1x32xf32>
    %cst_16 = arith.constant 0.000000e+00 : f32
    %30 = vector.broadcast %cst_16 : f32 to vector<1x32xf32>
    %31 = arith.maximumf %29, %30 : vector<1x32xf32>
    %c0_17 = arith.constant 0 : index
    %c896 = arith.constant 896 : index
    %32 = vector.load %arg2[%c0_17, %c896] : memref<32x1408xf32, #tpu.memory_space<vmem>>, vector<32x384xf32>
    %cst_18 = arith.constant dense<0.000000e+00> : vector<1x384xf32>
    %33 = tpu.matmul %31, %32, %cst_18 {dimension_numbers = #tpu.dot_dimension_numbers<[1], [0], [0], [1], [0, 0, 1, 1], [], []>} : vector<1x32xf32>, vector<32x384xf32>, vector<1x384xf32> -> vector<1x384xf32>
    %34 = vector.extract_strided_slice %33 {offsets = [0, 0], sizes = [1, 32], strides = [1, 1]} : vector<1x384xf32> to vector<1x32xf32>
    %c0_19 = arith.constant 0 : index
    %c896_20 = arith.constant 896 : index
    %35 = vector.load %arg3[%c0_19, %c896_20] : memref<1x1408xf32, #tpu.memory_space<vmem>>, vector<1x32xf32>
    %36 = arith.addf %34, %35 : vector<1x32xf32>
    %37 = vector.extract_strided_slice %33 {offsets = [0, 128], sizes = [1, 32], strides = [1, 1]} : vector<1x384xf32> to vector<1x32xf32>
    %c0_21 = arith.constant 0 : index
    %c1024 = arith.constant 1024 : index
    %38 = vector.load %arg3[%c0_21, %c1024] : memref<1x1408xf32, #tpu.memory_space<vmem>>, vector<1x32xf32>
    %39 = arith.addf %37, %38 : vector<1x32xf32>
    %40 = vector.extract_strided_slice %33 {offsets = [0, 256], sizes = [1, 32], strides = [1, 1]} : vector<1x384xf32> to vector<1x32xf32>
    %c0_22 = arith.constant 0 : index
    %c1152 = arith.constant 1152 : index
    %41 = vector.load %arg3[%c0_22, %c1152] : memref<1x1408xf32, #tpu.memory_space<vmem>>, vector<1x32xf32>
    %42 = arith.addf %40, %41 : vector<1x32xf32>
    %43 = vector.extract_strided_slice %5 {offsets = [0, 128], sizes = [1, 32], strides = [1, 1]} : vector<1x512xf32> to vector<1x32xf32>
    %c0_23 = arith.constant 0 : index
    %c384 = arith.constant 384 : index
    %44 = vector.load %arg3[%c0_23, %c384] : memref<1x1408xf32, #tpu.memory_space<vmem>>, vector<1x32xf32>
    %45 = arith.addf %43, %44 : vector<1x32xf32>
    %46 = vector.extract_strided_slice %5 {offsets = [0, 256], sizes = [1, 32], strides = [1, 1]} : vector<1x512xf32> to vector<1x32xf32>
    %c0_24 = arith.constant 0 : index
    %c512 = arith.constant 512 : index
    %47 = vector.load %arg3[%c0_24, %c512] : memref<1x1408xf32, #tpu.memory_space<vmem>>, vector<1x32xf32>
    %48 = arith.addf %46, %47 : vector<1x32xf32>
    %49 = vector.extract_strided_slice %5 {offsets = [0, 384], sizes = [1, 32], strides = [1, 1]} : vector<1x512xf32> to vector<1x32xf32>
    %c0_25 = arith.constant 0 : index
    %c640 = arith.constant 640 : index
    %50 = vector.load %arg3[%c0_25, %c640] : memref<1x1408xf32, #tpu.memory_space<vmem>>, vector<1x32xf32>
    %51 = arith.addf %49, %50 : vector<1x32xf32>
    %52 = arith.addf %36, %45 : vector<1x32xf32>
    %53 = arith.negf %52 : vector<1x32xf32>
    %54 = math.exp %53 : vector<1x32xf32>
    %cst_26 = arith.constant 1.000000e+00 : f32
    %55 = vector.broadcast %cst_26 : f32 to vector<1x32xf32>
    %56 = arith.addf %55, %54 : vector<1x32xf32>
    %57 = arith.divf %55, %56 : vector<1x32xf32>
    %58 = arith.addf %39, %48 : vector<1x32xf32>
    %59 = arith.negf %58 : vector<1x32xf32>
    %60 = math.exp %59 : vector<1x32xf32>
    %cst_27 = arith.constant 1.000000e+00 : f32
    %61 = vector.broadcast %cst_27 : f32 to vector<1x32xf32>
    %62 = arith.addf %61, %60 : vector<1x32xf32>
    %63 = arith.divf %61, %62 : vector<1x32xf32>
    %64 = arith.mulf %57, %51 : vector<1x32xf32>
    %65 = arith.addf %42, %64 : vector<1x32xf32>
    %66 = math.tanh %65 : vector<1x32xf32>
    %cst_28 = arith.constant 1.000000e+00 : f32
    %67 = vector.broadcast %cst_28 : f32 to vector<1x32xf32>
    %68 = arith.subf %67, %63 : vector<1x32xf32>
    %69 = arith.mulf %68, %66 : vector<1x32xf32>
    %70 = arith.mulf %63, %1 : vector<1x32xf32>
    %71 = arith.addf %69, %70 : vector<1x32xf32>
    %c0_29 = arith.constant 0 : index
    %c1280 = arith.constant 1280 : index
    %72 = vector.load %arg2[%c0_29, %c1280] : memref<32x1408xf32, #tpu.memory_space<vmem>>, vector<32x128xf32>
    %cst_30 = arith.constant dense<0.000000e+00> : vector<1x128xf32>
    %73 = tpu.matmul %71, %72, %cst_30 {dimension_numbers = #tpu.dot_dimension_numbers<[1], [0], [0], [1], [0, 0, 1, 1], [], []>} : vector<1x32xf32>, vector<32x128xf32>, vector<1x128xf32> -> vector<1x128xf32>
    %74 = vector.extract_strided_slice %73 {offsets = [0, 0], sizes = [1, 64], strides = [1, 1]} : vector<1x128xf32> to vector<1x64xf32>
    %c0_31 = arith.constant 0 : index
    %c1280_32 = arith.constant 1280 : index
    %75 = vector.load %arg3[%c0_31, %c1280_32] : memref<1x1408xf32, #tpu.memory_space<vmem>>, vector<1x64xf32>
    %76 = arith.addf %74, %75 : vector<1x64xf32>
    %cst_33 = arith.constant dense<0xFF800000> : vector<1xf32>
    %77 = vector.multi_reduction <maximumf>, %76, %cst_33 [1] : vector<1x64xf32> to vector<1xf32>
    %78 = vector.shape_cast %77 : vector<1xf32> to vector<1x1xf32>
    %79 = vector.broadcast %78 : vector<1x1xf32> to vector<1x64xf32>
    %80 = arith.subf %76, %79 : vector<1x64xf32>
    %81 = vector.broadcast %78 : vector<1x1xf32> to vector<1x64xf32>
    %82 = arith.subf %76, %81 : vector<1x64xf32>
    %83 = math.exp %82 : vector<1x64xf32>
    %cst_34 = arith.constant dense<0.000000e+00> : vector<1xf32>
    %84 = vector.multi_reduction <add>, %83, %cst_34 [1] : vector<1x64xf32> to vector<1xf32>
    %85 = vector.shape_cast %84 : vector<1xf32> to vector<1x1xf32>
    %86 = math.log %85 : vector<1x1xf32>
    %87 = vector.broadcast %86 : vector<1x1xf32> to vector<1x64xf32>
    %88 = arith.subf %80, %87 : vector<1x64xf32>
    %c0_35 = arith.constant 0 : index
    %c0_36 = arith.constant 0 : index
    %89 = vector.load %arg4[%c0_35, %c0_36] : memref<3x128xf32, #tpu.memory_space<vmem>>, vector<1x64xf32>
    tpu.vector_store %arg4[%c0_35, %c0_36], %88 {strides = array<i32>} : memref<3x128xf32, #tpu.memory_space<vmem>>, vector<1x64xf32>,
    %c1_37 = arith.constant 1 : index
    %c0_38 = arith.constant 0 : index
    %90 = vector.load %arg4[%c1_37, %c0_38] : memref<3x128xf32, #tpu.memory_space<vmem>>, vector<1x32xf32>
    tpu.vector_store %arg4[%c1_37, %c0_38], %71 {strides = array<i32>} : memref<3x128xf32, #tpu.memory_space<vmem>>, vector<1x32xf32>,
    %c2 = arith.constant 2 : index
    %c0_39 = arith.constant 0 : index
    %91 = vector.load %arg4[%c2, %c0_39] : memref<3x128xf32, #tpu.memory_space<vmem>>, vector<1x16xf32>
    tpu.vector_store %arg4[%c2, %c0_39], %20 {strides = array<i32>} : memref<3x128xf32, #tpu.memory_space<vmem>>, vector<1x16xf32>,
    return
  }
}

</mosaic_0001>

<llo_original>
// kernel: _attn_decoder_step.1
$region0: #{_attn_decoder_step.1}
  #allocation0 [shape = 'u32[]', space=smem, size = 0x4, offset = 0x4, fixed_abs, tag = 'smem constant byte address 0x4 - core index']
  #allocation1 [shape = 'u32[144,128]{1,0:T(1,128)}', space=vmem, size = 0x12000, scoped, tag = 'internal scratch']
  %s0 = inlined_call_operand.vmem [shape: f32[2,32], index: 0, kind: input, shape index: {}]
  %s1 = inlined_call_operand.vmem [shape: f32[16,32], index: 1, kind: input, shape index: {}]
  %s2 = inlined_call_operand.hbm [shape: f32[32,1408], index: 2, kind: input, shape index: {}]
  %s3 = inlined_call_operand.vmem [shape: f32[1,1408], index: 3, kind: input, shape index: {}]
  %s4 = inlined_call_operand.vmem [shape: f32[3,128], index: 4, kind: output, shape index: {}]
  %s5 = sld [smem:[#allocation0]]
  $region30: #{_attn_decoder_step.1} parent=0
    _
  %s7 = ssub.s32 1, %s5
  %s8 = scalar_select 0, %s7, %s5
  $region1: #{_attn_decoder_step.1} parent=0
    #allocation2 [shape = 'u8[180224]{0}', space=vmem, size = 0x2c000, scoped, tag = 'input window, operand 2, single buffered']
    #allocation3 [shape = 's32[1]{0}', space=sflag, size = 0x4, scoped, tag = 'scoped memory for _attn_decoder_step.1']
    %9 = vsyncpa [#allocation3], 0
    // Predicated region
    $region2: #{_attn_decoder_step.1} parent=1 // pred_check
      _
    $region3: #{_attn_decoder_step.1} parent=1 // pred_check_branch
      %11 = sbr.rel (0) target = $region5
    $region4: #{_attn_decoder_step.1} parent=1 // pred_region
      _
    $region5: #{_attn_decoder_step.1} parent=1 // pred_fallthru
      _
    // Predicated region
    $region6: #{_attn_decoder_step.1} parent=1 // pred_check
      _
    $region7: #{_attn_decoder_step.1} parent=1 // pred_check_branch
      %13 = sbr.rel (0) target = $region9
    $region8: #{_attn_decoder_step.1} parent=1 // pred_region
      _
    $region9: #{_attn_decoder_step.1} parent=1 // pred_fallthru
      _
    // Predicated region
    $region10: #{_attn_decoder_step.1} parent=1 // pred_check
      _
    $region11: #{_attn_decoder_step.1} parent=1 // pred_check_branch
      %15 = sbr.rel (0) target = $region13
    $region12: #{_attn_decoder_step.1} parent=1 // pred_region
      %s17 = ssub.s32 5632, 5632
      %18 = vsyncadd [#allocation3], %s17
      %s19 = sshll.u32 [#allocation2], 4
      %s20 = int_to_ptr.vmem [resolvable:$true] %s19
      %25 = dma.hbm_to_vmem [thread:$0]  %s2, 5632, %s20, [#allocation3], 1408, 1408, 88
    $region13: #{_attn_decoder_step.1} parent=1 // pred_fallthru
      _
    // Predicated region
    $region14: #{_attn_decoder_step.1} parent=1 // pred_check
      _
    $region15: #{_attn_decoder_step.1} parent=1 // pred_check_branch
      %27 = sbr.rel (0) target = $region17
    $region16: #{_attn_decoder_step.1} parent=1 // pred_region
      _
    $region17: #{_attn_decoder_step.1} parent=1 // pred_fallthru
      _
    // Predicated region
    $region18: #{_attn_decoder_step.1} parent=1 // pred_check
      _
    $region19: #{_attn_decoder_step.1} parent=1 // pred_check_branch
      %29 = sbr.rel (0) target = $region21
    $region20: #{_attn_decoder_step.1} parent=1 // pred_region
      %30 = dma.done [#allocation3], 5632
    $region21: #{_attn_decoder_step.1} parent=1 // pred_fallthru
      _
    %v31 = vld [vmem:[%s0] sm:$0x1]
    %v32 = vld [vmem:[%s0 + $0x1] sm:$0x1]
    %v33 = vld [vmem:[#allocation2] sm:$0xff]
    %v34 = vld [vmem:[#allocation2 + $0x8] sm:$0xff]
    %v35 = vld [vmem:[#allocation2 + $0x58] sm:$0xff]
    %v36 = vld [vmem:[#allocation2 + $0x60] sm:$0xff]
    %v37 = vld [vmem:[#allocation2 + $0xb0] sm:$0xff]
    %v38 = vld [vmem:[#allocation2 + $0xb8] sm:$0xff]
    %v39 = vld [vmem:[#allocation2 + $0x108] sm:$0xff]
    %v40 = vld [vmem:[#allocation2 + $0x110] sm:$0xff]
    %vm41 = vcmask 261120
    %v43 = vsel %vm41, %v31, 0
    %45 = vmatprep.subr.mxu0 %v34
    %46 = vmatpush1.msra.mxu0 %v33
    %47 = vmatprep.subr.mxu0 %v36
    %48 = vmatpush1.msra.mxu0 %v35
    %49 = vmatprep.subr.mxu0 %v38
    %50 = vmatpush1.msra.mxu0 %v37
    %51 = vmatprep.subr.mxu0 %v40
    %52 = vmatpush1.msra.mxu0 %v39
    %53 = vmatprep.subr.mxu0 0.0
    %54 = vmatpush1.msra.mxu0 0.0
    %55 = vmatprep.subr.mxu0 0.0
    %56 = vmatpush1.msra.mxu0 0.0
    %57 = vmatprep.subr.mxu0 0.0
    %58 = vmatpush1.msra.mxu0 0.0
    %59 = vmatprep.subr.mxu0 0.0
    %60 = vmatpush1.msra.mxu0 0.0
    %61 = vmatprep.subr.mxu0 0.0
    %62 = vmatpush1.msra.mxu0 0.0
    %63 = vmatprep.subr.mxu0 0.0
    %64 = vmatpush1.msra.mxu0 0.0
    %65 = vmatprep.subr.mxu0 0.0
    %66 = vmatpush1.msra.mxu0 0.0
    %67 = vmatprep.subr.mxu0 0.0
    %68 = vmatpush1.msra.mxu0 0.0
    %69 = vmatprep.subr.mxu0 0.0
    %70 = vmatpush1.msra.mxu0 0.0
    %71 = vmatprep.subr.mxu0 0.0
    %72 = vmatpush1.msra.mxu0 0.0
    %73 = vmatprep.subr.mxu0 0.0
    %74 = vmatpush1.msra.mxu0 0.0
    %75 = vmatprep.subr.mxu0 0.0
    %76 = vmatpush1.msra.mxu0 0.0
    %77 = vmatprep.subr.mxu0 0.0
    %78 = vmatpush1.msra.mxu0 0.0
    %79 = vmatprep.subr.mxu0 0.0
    %80 = vmatpush1.msra.mxu0 0.0
    %81 = vmatprep.subr.mxu0 0.0
    %82 = vmatpush1.msra.mxu0 0.0
    %83 = vmatprep.subr.mxu0 0.0
    %84 = vmatpush1.msra.mxu0 0.0
    %85 = vmatprep.subr.mxu0 0.0
    %86 = vmatpush1.msra.mxu0 0.0
    %87 = vmatprep.subr.mxu0 0.0
    %88 = vmatpush1.msra.mxu0 0.0
    %89 = vmatprep.subr.mxu0 0.0
    %90 = vmatpush1.msra.mxu0 0.0
    %91 = vmatprep.subr.mxu0 0.0
    %92 = vmatpush1.msra.mxu0 0.0
    %93 = vmatprep.subr.mxu0 0.0
    %94 = vmatpush1.msra.mxu0 0.0
    %95 = vmatprep.subr.mxu0 0.0
    %96 = vmatpush1.msra.mxu0 0.0
    %97 = vmatprep.subr.mxu0 0.0
    %98 = vmatpush1.msra.mxu0 0.0
    %99 = vmatprep.subr.mxu0 0.0
    %100 = vmatpush1.msra.mxu0 0.0
    %101 = vmatprep.subr.mxu0 0.0
    %102 = vmatpush1.msra.mxu0 0.0
    %103 = vmatprep.subr.mxu0 0.0
    %104 = vmatpush1.msra.mxu0 0.0
    %105 = vmatprep.subr.mxu0 0.0
    %106 = vmatpush1.msra.mxu0 0.0
    %107 = vmatprep.subr.mxu0 0.0
    %108 = vmatpush1.msra.mxu0 0.0
    %109 = vmatprep.mubr.f32.mxu0 0.0
    %110 = vmatmul.mubr.f32.gmra.mrb[0].mxu0 %v43
    %v111 = vpop.f32.mrb[0].mxu0
    %v112 = vadd.f32 0.0, %v111
    %v113 = vpop.f32.mrb[0].mxu0
    %v114 = vadd.f32 0.0, %v113
    %115 = vdwg.mxu0
    %v116 = vld [vmem:[#allocation2 + $0x10] sm:$0xff]
    %v117 = vld [vmem:[#allocation2 + $0x18] sm:$0xff]
    %v118 = vld [vmem:[#allocation2 + $0x20] sm:$0xff]
    %v119 = vld [vmem:[#allocation2 + $0x28] sm:$0xff]
    %v120 = vld [vmem:[#allocation2 + $0x68] sm:$0xff]
    %v121 = vld [vmem:[#allocation2 + $0x70] sm:$0xff]
    %v122 = vld [vmem:[#allocation2 + $0x78] sm:$0xff]
    %v123 = vld [vmem:[#allocation2 + $0x80] sm:$0xff]
    %v124 = vld [vmem:[#allocation2 + $0xc0] sm:$0xff]
    %v125 = vld [vmem:[#allocation2 + $0xc8] sm:$0xff]
    %v126 = vld [vmem:[#allocation2 + $0xd0] sm:$0xff]
    %v127 = vld [vmem:[#allocation2 + $0xd8] sm:$0xff]
    %v128 = vld [vmem:[#allocation2 + $0x118] sm:$0xff]
    %v129 = vld [vmem:[#allocation2 + $0x120] sm:$0xff]
    %v130 = vld [vmem:[#allocation2 + $0x128] sm:$0xff]
    %v131 = vld [vmem:[#allocation2 + $0x130] sm:$0xff]
    %v133 = vsel %vm41, %v32, 0
    %135 = vmatprep.subr.mxu0 %v117
    %136 = vmatpush1.msra.mxu0 %v116
    %137 = vmatprep.subr.mxu0 %v121
    %138 = vmatpush1.msra.mxu0 %v120
    %139 = vmatprep.subr.mxu0 %v125
    %140 = vmatpush1.msra.mxu0 %v124
    %141 = vmatprep.subr.mxu0 %v129
    %142 = vmatpush1.msra.mxu0 %v128
    %143 = vmatprep.subr.mxu0 0.0
    %144 = vmatpush1.msra.mxu0 0.0
    %145 = vmatprep.subr.mxu0 0.0
    %146 = vmatpush1.msra.mxu0 0.0
    %147 = vmatprep.subr.mxu0 0.0
    %148 = vmatpush1.msra.mxu0 0.0
    %149 = vmatprep.subr.mxu0 0.0
    %150 = vmatpush1.msra.mxu0 0.0
    %151 = vmatprep.subr.mxu0 0.0
    %152 = vmatpush1.msra.mxu0 0.0
    %153 = vmatprep.subr.mxu0 0.0
    %154 = vmatpush1.msra.mxu0 0.0
    %155 = vmatprep.subr.mxu0 0.0
    %156 = vmatpush1.msra.mxu0 0.0
    %157 = vmatprep.subr.mxu0 0.0
    %158 = vmatpush1.msra.mxu0 0.0
    %159 = vmatprep.subr.mxu0 0.0
    %160 = vmatpush1.msra.mxu0 0.0
    %161 = vmatprep.subr.mxu0 0.0
    %162 = vmatpush1.msra.mxu0 0.0
    %163 = vmatprep.subr.mxu0 0.0
    %164 = vmatpush1.msra.mxu0 0.0
    %165 = vmatprep.subr.mxu0 0.0
    %166 = vmatpush1.msra.mxu0 0.0
    %167 = vmatprep.subr.mxu0 0.0
    %168 = vmatpush1.msra.mxu0 0.0
    %169 = vmatprep.subr.mxu0 0.0
    %170 = vmatpush1.msra.mxu0 0.0
    %171 = vmatprep.subr.mxu0 0.0
    %172 = vmatpush1.msra.mxu0 0.0
    %173 = vmatprep.subr.mxu0 0.0
    %174 = vmatpush1.msra.mxu0 0.0
    %175 = vmatprep.subr.mxu0 0.0
    %176 = vmatpush1.msra.mxu0 0.0
    %177 = vmatprep.subr.mxu0 0.0
    %178 = vmatpush1.msra.mxu0 0.0
    %179 = vmatprep.subr.mxu0 0.0
    %180 = vmatpush1.msra.mxu0 0.0
    %181 = vmatprep.subr.mxu0 0.0
    %182 = vmatpush1.msra.mxu0 0.0
    %183 = vmatprep.subr.mxu0 0.0
    %184 = vmatpush1.msra.mxu0 0.0
    %185 = vmatprep.subr.mxu0 0.0
    %186 = vmatpush1.msra.mxu0 0.0
    %187 = vmatprep.subr.mxu0 0.0
    %188 = vmatpush1.msra.mxu0 0.0
    %189 = vmatprep.subr.mxu0 0.0
    %190 = vmatpush1.msra.mxu0 0.0
    %191 = vmatprep.subr.mxu0 0.0
    %192 = vmatpush1.msra.mxu0 0.0
    %193 = vmatprep.subr.mxu0 0.0
    %194 = vmatpush1.msra.mxu0 0.0
    %195 = vmatprep.subr.mxu0 0.0
    %196 = vmatpush1.msra.mxu0 0.0
    %197 = vmatprep.subr.mxu0 0.0
    %198 = vmatpush1.msra.mxu0 0.0
    %199 = vmatprep.mubr.f32.mxu0 0.0
    %200 = vmatmul.mubr.f32.gmra.mrb[0].mxu0 %v133
    %v201 = vpop.f32.mrb[0].mxu0
    %v202 = vadd.f32 0.0, %v201
    %v203 = vpop.f32.mrb[0].mxu0
    %v204 = vadd.f32 0.0, %v203
    %205 = vdwg.mxu0
    %206 = vmatprep.subr.mxu0 %v119
    %207 = vmatpush1.msra.mxu0 %v118
    %208 = vmatprep.subr.mxu0 %v123
    %209 = vmatpush1.msra.mxu0 %v122
    %210 = vmatprep.subr.mxu0 %v127
    %211 = vmatpush1.msra.mxu0 %v126
    %212 = vmatprep.subr.mxu0 %v131
    %213 = vmatpush1.msra.mxu0 %v130
    %214 = vmatprep.subr.mxu0 0.0
    %215 = vmatpush1.msra.mxu0 0.0
    %216 = vmatprep.subr.mxu0 0.0
    %217 = vmatpush1.msra.mxu0 0.0
    %218 = vmatprep.subr.mxu0 0.0
    %219 = vmatpush1.msra.mxu0 0.0
    %220 = vmatprep.subr.mxu0 0.0
    %221 = vmatpush1.msra.mxu0 0.0
    %222 = vmatprep.subr.mxu0 0.0
    %223 = vmatpush1.msra.mxu0 0.0
    %224 = vmatprep.subr.mxu0 0.0
    %225 = vmatpush1.msra.mxu0 0.0
    %226 = vmatprep.subr.mxu0 0.0
    %227 = vmatpush1.msra.mxu0 0.0
    %228 = vmatprep.subr.mxu0 0.0
    %229 = vmatpush1.msra.mxu0 0.0
    %230 = vmatprep.subr.mxu0 0.0
    %231 = vmatpush1.msra.mxu0 0.0
    %232 = vmatprep.subr.mxu0 0.0
    %233 = vmatpush1.msra.mxu0 0.0
    %234 = vmatprep.subr.mxu0 0.0
    %235 = vmatpush1.msra.mxu0 0.0
    %236 = vmatprep.subr.mxu0 0.0
    %237 = vmatpush1.msra.mxu0 0.0
    %238 = vmatprep.subr.mxu0 0.0
    %239 = vmatpush1.msra.mxu0 0.0
    %240 = vmatprep.subr.mxu0 0.0
    %241 = vmatpush1.msra.mxu0 0.0
    %242 = vmatprep.subr.mxu0 0.0
    %243 = vmatpush1.msra.mxu0 0.0
    %244 = vmatprep.subr.mxu0 0.0
    %245 = vmatpush1.msra.mxu0 0.0
    %246 = vmatprep.subr.mxu0 0.0
    %247 = vmatpush1.msra.mxu0 0.0
    %248 = vmatprep.subr.mxu0 0.0
    %249 = vmatpush1.msra.mxu0 0.0
    %250 = vmatprep.subr.mxu0 0.0
    %251 = vmatpush1.msra.mxu0 0.0
    %252 = vmatprep.subr.mxu0 0.0
    %253 = vmatpush1.msra.mxu0 0.0
    %254 = vmatprep.subr.mxu0 0.0
    %255 = vmatpush1.msra.mxu0 0.0
    %256 = vmatprep.subr.mxu0 0.0
    %257 = vmatpush1.msra.mxu0 0.0
    %258 = vmatprep.subr.mxu0 0.0
    %259 = vmatpush1.msra.mxu0 0.0
    %260 = vmatprep.subr.mxu0 0.0
    %261 = vmatpush1.msra.mxu0 0.0
    %262 = vmatprep.subr.mxu0 0.0
    %263 = vmatpush1.msra.mxu0 0.0
    %264 = vmatprep.subr.mxu0 0.0
    %265 = vmatpush1.msra.mxu0 0.0
    %266 = vmatprep.subr.mxu0 0.0
    %267 = vmatpush1.msra.mxu0 0.0
    %268 = vmatprep.subr.mxu0 0.0
    %269 = vmatpush1.msra.mxu0 0.0
    %270 = vmatprep.mubr.f32.mxu0 0.0
    %271 = vmatmul.mubr.f32.gmra.mrb[0].mxu0 %v133
    %v272 = vpop.f32.mrb[0].mxu0
    %v273 = vadd.f32 0.0, %v272
    %v274 = vpop.f32.mrb[0].mxu0
    %v275 = vadd.f32 0.0, %v274
    %276 = vdwg.mxu0
    %v277 = vadd.f32 %v112, %v202
    %v278 = vld [vmem:[%s3] sm:$0x1]
    %v279 = vadd.f32 %v277, %v278
    %vm280 = vcmask 122880
    %v281 = vsel %vm280, %v279, -inf
    %282 = vmax.xlane.f32.xlu0 %v281
    %v283 = vpop.xlane.xlu0 %282
    %v284 = vsub.f32 %v279, %v283
    %v285 = vmul.f32 %v284, 1.442695
    %v286 = vpow.pop %v285
    %v287 = vsel %vm280, %v286, 0.0
    %288 = vadd.xlane.f32.xlu0 %v287
    %v289 = vpop.xlane.xlu0 %288
    %v290 = vrcp.pop %v289
    %v291 = vmul.f32 %v286, %v290
    %v292 = vld [vmem:[%s1] sm:$0xff]
    %v293 = vld [vmem:[%s1 + $0x8] sm:$0xff]
    %vm294 = vcmask 130048
    %v296 = vsel %vm294, %v291, 0
    %298 = vmatprep.subr.mxu0 0.0
    %299 = vmatpush1.msra.mxu0 %v292
    %300 = vmatprep.subr.mxu0 0.0
    %301 = vmatpush1.msra.mxu0 %v293
    %302 = vmatprep.subr.mxu0 0.0
    %303 = vmatpush1.msra.mxu0 0.0
    %304 = vmatprep.subr.mxu0 0.0
    %305 = vmatpush1.msra.mxu0 0.0
    %306 = vmatprep.subr.mxu0 0.0
    %307 = vmatpush1.msra.mxu0 0.0
    %308 = vmatprep.subr.mxu0 0.0
    %309 = vmatpush1.msra.mxu0 0.0
    %310 = vmatprep.subr.mxu0 0.0
    %311 = vmatpush1.msra.mxu0 0.0
    %312 = vmatprep.subr.mxu0 0.0
    %313 = vmatpush1.msra.mxu0 0.0
    %314 = vmatprep.subr.mxu0 0.0
    %315 = vmatpush1.msra.mxu0 0.0
    %316 = vmatprep.subr.mxu0 0.0
    %317 = vmatpush1.msra.mxu0 0.0
    %318 = vmatprep.subr.mxu0 0.0
    %319 = vmatpush1.msra.mxu0 0.0
    %320 = vmatprep.subr.mxu0 0.0
    %321 = vmatpush1.msra.mxu0 0.0
    %322 = vmatprep.subr.mxu0 0.0
    %323 = vmatpush1.msra.mxu0 0.0
    %324 = vmatprep.subr.mxu0 0.0
    %325 = vmatpush1.msra.mxu0 0.0
    %326 = vmatprep.subr.mxu0 0.0
    %327 = vmatpush1.msra.mxu0 0.0
    %328 = vmatprep.subr.mxu0 0.0
    %329 = vmatpush1.msra.mxu0 0.0
    %330 = vmatprep.subr.mxu0 0.0
    %331 = vmatpush1.msra.mxu0 0.0
    %332 = vmatprep.subr.mxu0 0.0
    %333 = vmatpush1.msra.mxu0 0.0
    %334 = vmatprep.subr.mxu0 0.0
    %335 = vmatpush1.msra.mxu0 0.0
    %336 = vmatprep.subr.mxu0 0.0
    %337 = vmatpush1.msra.mxu0 0.0
    %338 = vmatprep.subr.mxu0 0.0
    %339 = vmatpush1.msra.mxu0 0.0
    %340 = vmatprep.subr.mxu0 0.0
    %341 = vmatpush1.msra.mxu0 0.0
    %342 = vmatprep.subr.mxu0 0.0
    %343 = vmatpush1.msra.mxu0 0.0
    %344 = vmatprep.subr.mxu0 0.0
    %345 = vmatpush1.msra.mxu0 0.0
    %346 = vmatprep.subr.mxu0 0.0
    %347 = vmatpush1.msra.mxu0 0.0
    %348 = vmatprep.subr.mxu0 0.0
    %349 = vmatpush1.msra.mxu0 0.0
    %350 = vmatprep.subr.mxu0 0.0
    %351 = vmatpush1.msra.mxu0 0.0
    %352 = vmatprep.subr.mxu0 0.0
    %353 = vmatpush1.msra.mxu0 0.0
    %354 = vmatprep.subr.mxu0 0.0
    %355 = vmatpush1.msra.mxu0 0.0
    %356 = vmatprep.subr.mxu0 0.0
    %357 = vmatpush1.msra.mxu0 0.0
    %358 = vmatprep.subr.mxu0 0.0
    %359 = vmatpush1.msra.mxu0 0.0
    %360 = vmatprep.subr.mxu0 0.0
    %361 = vmatpush1.msra.mxu0 0.0
    %362 = vmatprep.mubr.f32.mxu0 0.0
    %363 = vmatmul.mubr.f32.gmra.mrb[0].mxu0 %v296
    %v364 = vpop.f32.mrb[0].mxu0
    %v365 = vadd.f32 0.0, %v364
    %v366 = vpop.f32.mrb[0].mxu0
    %367 = vdwg.mxu0
    %v368 = vld [vmem:[#allocation2 + $0x30] sm:$0xff]
    %v369 = vld [vmem:[#allocation2 + $0x88] sm:$0xff]
    %v370 = vld [vmem:[#allocation2 + $0xe0] sm:$0xff]
    %v371 = vld [vmem:[#allocation2 + $0x138] sm:$0xff]
    %v373 = vsel %vm41, %v365, 0
    %375 = vmatprep.subr.mxu0 0.0
    %376 = vmatpush1.msra.mxu0 %v368
    %377 = vmatprep.subr.mxu0 0.0
    %378 = vmatpush1.msra.mxu0 %v369
    %379 = vmatprep.subr.mxu0 0.0
    %380 = vmatpush1.msra.mxu0 %v370
    %381 = vmatprep.subr.mxu0 0.0
    %382 = vmatpush1.msra.mxu0 %v371
    %383 = vmatprep.subr.mxu0 0.0
    %384 = vmatpush1.msra.mxu0 0.0
    %385 = vmatprep.subr.mxu0 0.0
    %386 = vmatpush1.msra.mxu0 0.0
    %387 = vmatprep.subr.mxu0 0.0
    %388 = vmatpush1.msra.mxu0 0.0
    %389 = vmatprep.subr.mxu0 0.0
    %390 = vmatpush1.msra.mxu0 0.0
    %391 = vmatprep.subr.mxu0 0.0
    %392 = vmatpush1.msra.mxu0 0.0
    %393 = vmatprep.subr.mxu0 0.0
    %394 = vmatpush1.msra.mxu0 0.0
    %395 = vmatprep.subr.mxu0 0.0
    %396 = vmatpush1.msra.mxu0 0.0
    %397 = vmatprep.subr.mxu0 0.0
    %398 = vmatpush1.msra.mxu0 0.0
    %399 = vmatprep.subr.mxu0 0.0
    %400 = vmatpush1.msra.mxu0 0.0
    %401 = vmatprep.subr.mxu0 0.0
    %402 = vmatpush1.msra.mxu0 0.0
    %403 = vmatprep.subr.mxu0 0.0
    %404 = vmatpush1.msra.mxu0 0.0
    %405 = vmatprep.subr.mxu0 0.0
    %406 = vmatpush1.msra.mxu0 0.0
    %407 = vmatprep.subr.mxu0 0.0
    %408 = vmatpush1.msra.mxu0 0.0
    %409 = vmatprep.subr.mxu0 0.0
    %410 = vmatpush1.msra.mxu0 0.0
    %411 = vmatprep.subr.mxu0 0.0
    %412 = vmatpush1.msra.mxu0 0.0
    %413 = vmatprep.subr.mxu0 0.0
    %414 = vmatpush1.msra.mxu0 0.0
    %415 = vmatprep.subr.mxu0 0.0
    %416 = vmatpush1.msra.mxu0 0.0
    %417 = vmatprep.subr.mxu0 0.0
    %418 = vmatpush1.msra.mxu0 0.0
    %419 = vmatprep.subr.mxu0 0.0
    %420 = vmatpush1.msra.mxu0 0.0
    %421 = vmatprep.subr.mxu0 0.0
    %422 = vmatpush1.msra.mxu0 0.0
    %423 = vmatprep.subr.mxu0 0.0
    %424 = vmatpush1.msra.mxu0 0.0
    %425 = vmatprep.subr.mxu0 0.0
    %426 = vmatpush1.msra.mxu0 0.0
    %427 = vmatprep.subr.mxu0 0.0
    %428 = vmatpush1.msra.mxu0 0.0
    %429 = vmatprep.subr.mxu0 0.0
    %430 = vmatpush1.msra.mxu0 0.0
    %431 = vmatprep.subr.mxu0 0.0
    %432 = vmatpush1.msra.mxu0 0.0
    %433 = vmatprep.subr.mxu0 0.0
    %434 = vmatpush1.msra.mxu0 0.0
    %435 = vmatprep.subr.mxu0 0.0
    %436 = vmatpush1.msra.mxu0 0.0
    %437 = vmatprep.subr.mxu0 0.0
    %438 = vmatpush1.msra.mxu0 0.0
    %439 = vmatprep.mubr.f32.mxu0 0.0
    %440 = vmatmul.mubr.f32.gmra.mrb[0].mxu0 %v373
    %v441 = vpop.f32.mrb[0].mxu0
    %v442 = vadd.f32 0.0, %v441
    %v443 = vpop.f32.mrb[0].mxu0
    %444 = vdwg.mxu0
    %v445 = vadd.f32 %v114, %v442
    %v446 = vld [vmem:[%s3 + $0x1] sm:$0x1]
    %v447 = vadd.f32 %v445, %v446
    %v448 = vmax.f32 %v447, 0.0
    %v449 = vld [vmem:[#allocation2 + $0x38] sm:$0xff]
    %v450 = vld [vmem:[#allocation2 + $0x40] sm:$0xff]
    %v451 = vld [vmem:[#allocation2 + $0x48] sm:$0xff]
    %v452 = vld [vmem:[#allocation2 + $0x90] sm:$0xff]
    %v453 = vld [vmem:[#allocation2 + $0x98] sm:$0xff]
    %v454 = vld [vmem:[#allocation2 + $0xa0] sm:$0xff]
    %v455 = vld [vmem:[#allocation2 + $0xe8] sm:$0xff]
    %v456 = vld [vmem:[#allocation2 + $0xf0] sm:$0xff]
    %v457 = vld [vmem:[#allocation2 + $0xf8] sm:$0xff]
    %v458 = vld [vmem:[#allocation2 + $0x140] sm:$0xff]
    %v459 = vld [vmem:[#allocation2 + $0x148] sm:$0xff]
    %v460 = vld [vmem:[#allocation2 + $0x150] sm:$0xff]
    %v462 = vsel %vm41, %v448, 0
    %464 = vmatprep.subr.mxu0 %v450
    %465 = vmatpush1.msra.mxu0 %v449
    %466 = vmatprep.subr.mxu0 %v453
    %467 = vmatpush1.msra.mxu0 %v452
    %468 = vmatprep.subr.mxu0 %v456
    %469 = vmatpush1.msra.mxu0 %v455
    %470 = vmatprep.subr.mxu0 %v459
    %471 = vmatpush1.msra.mxu0 %v458
    %472 = vmatprep.subr.mxu0 0.0
    %473 = vmatpush1.msra.mxu0 0.0
    %474 = vmatprep.subr.mxu0 0.0
    %475 = vmatpush1.msra.mxu0 0.0
    %476 = vmatprep.subr.mxu0 0.0
    %477 = vmatpush1.msra.mxu0 0.0
    %478 = vmatprep.subr.mxu0 0.0
    %479 = vmatpush1.msra.mxu0 0.0
    %480 = vmatprep.subr.mxu0 0.0
    %481 = vmatpush1.msra.mxu0 0.0
    %482 = vmatprep.subr.mxu0 0.0
    %483 = vmatpush1.msra.mxu0 0.0
    %484 = vmatprep.subr.mxu0 0.0
    %485 = vmatpush1.msra.mxu0 0.0
    %486 = vmatprep.subr.mxu0 0.0
    %487 = vmatpush1.msra.mxu0 0.0
    %488 = vmatprep.subr.mxu0 0.0
    %489 = vmatpush1.msra.mxu0 0.0
    %490 = vmatprep.subr.mxu0 0.0
    %491 = vmatpush1.msra.mxu0 0.0
    %492 = vmatprep.subr.mxu0 0.0
    %493 = vmatpush1.msra.mxu0 0.0
    %494 = vmatprep.subr.mxu0 0.0
    %495 = vmatpush1.msra.mxu0 0.0
    %496 = vmatprep.subr.mxu0 0.0
    %497 = vmatpush1.msra.mxu0 0.0
    %498 = vmatprep.subr.mxu0 0.0
    %499 = vmatpush1.msra.mxu0 0.0
    %500 = vmatprep.subr.mxu0 0.0
    %501 = vmatpush1.msra.mxu0 0.0
    %502 = vmatprep.subr.mxu0 0.0
    %503 = vmatpush1.msra.mxu0 0.0
    %504 = vmatprep.subr.mxu0 0.0
    %505 = vmatpush1.msra.mxu0 0.0
    %506 = vmatprep.subr.mxu0 0.0
    %507 = vmatpush1.msra.mxu0 0.0
    %508 = vmatprep.subr.mxu0 0.0
    %509 = vmatpush1.msra.mxu0 0.0
    %510 = vmatprep.subr.mxu0 0.0
    %511 = vmatpush1.msra.mxu0 0.0
    %512 = vmatprep.subr.mxu0 0.0
    %513 = vmatpush1.msra.mxu0 0.0
    %514 = vmatprep.subr.mxu0 0.0
    %515 = vmatpush1.msra.mxu0 0.0
    %516 = vmatprep.subr.mxu0 0.0
    %517 = vmatpush1.msra.mxu0 0.0
    %518 = vmatprep.subr.mxu0 0.0
    %519 = vmatpush1.msra.mxu0 0.0
    %520 = vmatprep.subr.mxu0 0.0
    %521 = vmatpush1.msra.mxu0 0.0
    %522 = vmatprep.subr.mxu0 0.0
    %523 = vmatpush1.msra.mxu0 0.0
    %524 = vmatprep.subr.mxu0 0.0
    %525 = vmatpush1.msra.mxu0 0.0
    %526 = vmatprep.subr.mxu0 0.0
    %527 = vmatpush1.msra.mxu0 0.0
    %528 = vmatprep.mubr.f32.mxu0 0.0
    %529 = vmatmul.mubr.f32.gmra.mrb[0].mxu0 %v462
    %v530 = vpop.f32.mrb[0].mxu0
    %v531 = vadd.f32 0.0, %v530
    %v532 = vpop.f32.mrb[0].mxu0
    %v533 = vadd.f32 0.0, %v532
    %534 = vdwg.mxu0
    %535 = vmatprep.subr.mxu0 0.0
    %536 = vmatpush1.msra.mxu0 %v451
    %537 = vmatprep.subr.mxu0 0.0
    %538 = vmatpush1.msra.mxu0 %v454
    %539 = vmatprep.subr.mxu0 0.0
    %540 = vmatpush1.msra.mxu0 %v457
    %541 = vmatprep.subr.mxu0 0.0
    %542 = vmatpush1.msra.mxu0 %v460
    %543 = vmatprep.subr.mxu0 0.0
    %544 = vmatpush1.msra.mxu0 0.0
    %545 = vmatprep.subr.mxu0 0.0
    %546 = vmatpush1.msra.mxu0 0.0
    %547 = vmatprep.subr.mxu0 0.0
    %548 = vmatpush1.msra.mxu0 0.0
    %549 = vmatprep.subr.mxu0 0.0
    %550 = vmatpush1.msra.mxu0 0.0
    %551 = vmatprep.subr.mxu0 0.0
    %552 = vmatpush1.msra.mxu0 0.0
    %553 = vmatprep.subr.mxu0 0.0
    %554 = vmatpush1.msra.mxu0 0.0
    %555 = vmatprep.subr.mxu0 0.0
    %556 = vmatpush1.msra.mxu0 0.0
    %557 = vmatprep.subr.mxu0 0.0
    %558 = vmatpush1.msra.mxu0 0.0
    %559 = vmatprep.subr.mxu0 0.0
    %560 = vmatpush1.msra.mxu0 0.0
    %561 = vmatprep.subr.mxu0 0.0
    %562 = vmatpush1.msra.mxu0 0.0
    %563 = vmatprep.subr.mxu0 0.0
    %564 = vmatpush1.msra.mxu0 0.0
    %565 = vmatprep.subr.mxu0 0.0
    %566 = vmatpush1.msra.mxu0 0.0
    %567 = vmatprep.subr.mxu0 0.0
    %568 = vmatpush1.msra.mxu0 0.0
    %569 = vmatprep.subr.mxu0 0.0
    %570 = vmatpush1.msra.mxu0 0.0
    %571 = vmatprep.subr.mxu0 0.0
    %572 = vmatpush1.msra.mxu0 0.0
    %573 = vmatprep.subr.mxu0 0.0
    %574 = vmatpush1.msra.mxu0 0.0
    %575 = vmatprep.subr.mxu0 0.0
    %576 = vmatpush1.msra.mxu0 0.0
    %577 = vmatprep.subr.mxu0 0.0
    %578 = vmatpush1.msra.mxu0 0.0
    %579 = vmatprep.subr.mxu0 0.0
    %580 = vmatpush1.msra.mxu0 0.0
    %581 = vmatprep.subr.mxu0 0.0
    %582 = vmatpush1.msra.mxu0 0.0
    %583 = vmatprep.subr.mxu0 0.0
    %584 = vmatpush1.msra.mxu0 0.0
    %585 = vmatprep.subr.mxu0 0.0
    %586 = vmatpush1.msra.mxu0 0.0
    %587 = vmatprep.subr.mxu0 0.0
    %588 = vmatpush1.msra.mxu0 0.0
    %589 = vmatprep.subr.mxu0 0.0
    %590 = vmatpush1.msra.mxu0 0.0
    %591 = vmatprep.subr.mxu0 0.0
    %592 = vmatpush1.msra.mxu0 0.0
    %593 = vmatprep.subr.mxu0 0.0
    %594 = vmatpush1.msra.mxu0 0.0
    %595 = vmatprep.subr.mxu0 0.0
    %596 = vmatpush1.msra.mxu0 0.0
    %597 = vmatprep.subr.mxu0 0.0
    %598 = vmatpush1.msra.mxu0 0.0
    %599 = vmatprep.mubr.f32.mxu0 0.0
    %600 = vmatmul.mubr.f32.gmra.mrb[0].mxu0 %v462
    %v601 = vpop.f32.mrb[0].mxu0
    %v602 = vadd.f32 0.0, %v601
    %v603 = vpop.f32.mrb[0].mxu0
    %604 = vdwg.mxu0
    %v605 = vld [vmem:[%s3 + $0x7] sm:$0x1]
    %v606 = vadd.f32 %v531, %v605
    %v607 = vld [vmem:[%s3 + $0x8] sm:$0x1]
    %v608 = vadd.f32 %v533, %v607
    %v609 = vld [vmem:[%s3 + $0x9] sm:$0x1]
    %v610 = vadd.f32 %v602, %v609
    %v611 = vld [vmem:[%s3 + $0x3] sm:$0x1]
    %v612 = vadd.f32 %v204, %v611
    %v613 = vld [vmem:[%s3 + $0x4] sm:$0x1]
    %v614 = vadd.f32 %v273, %v613
    %v615 = vld [vmem:[%s3 + $0x5] sm:$0x1]
    %v616 = vadd.f32 %v275, %v615
    %v617 = vadd.f32 %v606, %v612
    %v618 = vxor.u32 %v617, 2147483648
    %v619 = vmul.f32 %v618, 1.442695
    %v620 = vpow.pop %v619
    %v621 = vadd.f32 %v620, 1.0
    %v622 = vrcp.pop %v621
    %v623 = vmul.f32 1.0, %v622
    %v624 = vadd.f32 %v608, %v614
    %v625 = vxor.u32 %v624, 2147483648
    %v626 = vmul.f32 %v625, 1.442695
    %v627 = vpow.pop %v626
    %v628 = vadd.f32 %v627, 1.0
    %v629 = vrcp.pop %v628
    %v630 = vmul.f32 1.0, %v629
    %v631 = vmul.f32 %v623, %v616
    %v632 = vadd.f32 %v610, %v631
    %v633 = vtanh.pop %v632
    %v634 = vsub.f32 1.0, %v630
    %v635 = vmul.f32 %v634, %v633
    %v636 = vmul.f32 %v630, %v32
    %v637 = vadd.f32 %v635, %v636
    %v638 = vld [vmem:[#allocation2 + $0x50] sm:$0xff]
    %v639 = vld [vmem:[#allocation2 + $0xa8] sm:$0xff]
    %v640 = vld [vmem:[#allocation2 + $0x100] sm:$0xff]
    %v641 = vld [vmem:[#allocation2 + $0x158] sm:$0xff]
    %v643 = vsel %vm41, %v637, 0
    %645 = vmatprep.subr.mxu0 0.0
    %646 = vmatpush1.msra.mxu0 %v638
    %647 = vmatprep.subr.mxu0 0.0
    %648 = vmatpush1.msra.mxu0 %v639
    %649 = vmatprep.subr.mxu0 0.0
    %650 = vmatpush1.msra.mxu0 %v640
    %651 = vmatprep.subr.mxu0 0.0
    %652 = vmatpush1.msra.mxu0 %v641
    %653 = vmatprep.subr.mxu0 0.0
    %654 = vmatpush1.msra.mxu0 0.0
    %655 = vmatprep.subr.mxu0 0.0
    %656 = vmatpush1.msra.mxu0 0.0
    %657 = vmatprep.subr.mxu0 0.0
    %658 = vmatpush1.msra.mxu0 0.0
    %659 = vmatprep.subr.mxu0 0.0
    %660 = vmatpush1.msra.mxu0 0.0
    %661 = vmatprep.subr.mxu0 0.0
    %662 = vmatpush1.msra.mxu0 0.0
    %663 = vmatprep.subr.mxu0 0.0
    %664 = vmatpush1.msra.mxu0 0.0
    %665 = vmatprep.subr.mxu0 0.0
    %666 = vmatpush1.msra.mxu0 0.0
    %667 = vmatprep.subr.mxu0 0.0
    %668 = vmatpush1.msra.mxu0 0.0
    %669 = vmatprep.subr.mxu0 0.0
    %670 = vmatpush1.msra.mxu0 0.0
    %671 = vmatprep.subr.mxu0 0.0
    %672 = vmatpush1.msra.mxu0 0.0
    %673 = vmatprep.subr.mxu0 0.0
    %674 = vmatpush1.msra.mxu0 0.0
    %675 = vmatprep.subr.mxu0 0.0
    %676 = vmatpush1.msra.mxu0 0.0
    %677 = vmatprep.subr.mxu0 0.0
    %678 = vmatpush1.msra.mxu0 0.0
    %679 = vmatprep.subr.mxu0 0.0
    %680 = vmatpush1.msra.mxu0 0.0
    %681 = vmatprep.subr.mxu0 0.0
    %682 = vmatpush1.msra.mxu0 0.0
    %683 = vmatprep.subr.mxu0 0.0
    %684 = vmatpush1.msra.mxu0 0.0
    %685 = vmatprep.subr.mxu0 0.0
    %686 = vmatpush1.msra.mxu0 0.0
    %687 = vmatprep.subr.mxu0 0.0
    %688 = vmatpush1.msra.mxu0 0.0
    %689 = vmatprep.subr.mxu0 0.0
    %690 = vmatpush1.msra.mxu0 0.0
    %691 = vmatprep.subr.mxu0 0.0
    %692 = vmatpush1.msra.mxu0 0.0
    %693 = vmatprep.subr.mxu0 0.0
    %694 = vmatpush1.msra.mxu0 0.0
    %695 = vmatprep.subr.mxu0 0.0
    %696 = vmatpush1.msra.mxu0 0.0
    %697 = vmatprep.subr.mxu0 0.0
    %698 = vmatpush1.msra.mxu0 0.0
    %699 = vmatprep.subr.mxu0 0.0
    %700 = vmatpush1.msra.mxu0 0.0
    %701 = vmatprep.subr.mxu0 0.0
    %702 = vmatpush1.msra.mxu0 0.0
    %703 = vmatprep.subr.mxu0 0.0
    %704 = vmatpush1.msra.mxu0 0.0
    %705 = vmatprep.subr.mxu0 0.0
    %706 = vmatpush1.msra.mxu0 0.0
    %707 = vmatprep.subr.mxu0 0.0
    %708 = vmatpush1.msra.mxu0 0.0
    %709 = vmatprep.mubr.f32.mxu0 0.0
    %710 = vmatmul.mubr.f32.gmra.mrb[0].mxu0 %v643
    %v711 = vpop.f32.mrb[0].mxu0
    %v712 = vadd.f32 0.0, %v711
    %v713 = vpop.f32.mrb[0].mxu0
    %714 = vdwg.mxu0
    %v715 = vld [vmem:[%s3 + $0xa] sm:$0x1]
    %v716 = vadd.f32 %v712, %v715
    %vm717 = vcmask 516096
    %v718 = vsel %vm717, %v716, -inf
    %719 = vmax.xlane.f32.xlu0 %v718
    %v720 = vpop.xlane.xlu0 %719
    %v721 = vsub.f32 %v716, %v720
    %v722 = vmul.f32 %v721, 1.442695
    %v723 = vpow.pop %v722
    %v724 = vsel %vm717, %v723, 0.0
    %725 = vadd.xlane.f32.xlu0 %v724
    %v726 = vpop.xlane.xlu0 %725
    %v727 = vlog2.pop %v726
    %v728 = vmul.f32 %v727, 0.6931472
    %v729 = vsub.f32 %v721, %v728
    %730 = vst.msk [vmem:[%s4] sm:$0x1] %vm717, %v729
    %vm731 = vcmask 253952
    %732 = vst.msk [vmem:[%s4 + $0x1] sm:$0x1] %vm731, %v637
    %733 = vst.msk [vmem:[%s4 + $0x2] sm:$0x1] %vm280, %v291
    // Predicated region
    $region22: #{_attn_decoder_step.1} parent=1 // pred_check
      _
    $region23: #{_attn_decoder_step.1} parent=1 // pred_check_branch
      %735 = sbr.rel (0) target = $region25
    $region24: #{_attn_decoder_step.1} parent=1 // pred_region
      _
    $region25: #{_attn_decoder_step.1} parent=1 // pred_fallthru
      _
    // Predicated region
    $region26: #{_attn_decoder_step.1} parent=1 // pred_check
      _
    $region27: #{_attn_decoder_step.1} parent=1 // pred_check_branch
      %737 = sbr.rel (0) target = $region29
    $region28: #{_attn_decoder_step.1} parent=1 // pred_region
      _
    $region29: #{_attn_decoder_step.1} parent=1 // pred_fallthru
      _
    %738 = vsyncpa [#allocation3], 1

</llo_original>
